<compile_context>
chip_gen: v7x
topology: tpu7x:2x2x1
jax: 0.10.0
libtpu: 0.0.40
codegen_flags: <defaults>
</compile_context>

<pallas_src>
import functools

import jax
import jax.numpy as jnp
from jax.experimental import pallas as pl
from jax.experimental.pallas import tpu as pltpu

LANE = 128        # pad weight/output last dims to multiples of this
ROW = 8           # sublane granularity for the batch axis
MAX_TILE_B = 512  # keep the f32 (tile_b, 128) hidden block comfortably in vregs


def _round_up(x, m):
    return (x + m - 1) // m * m


def _num_tensorcores():
    """Megacore chips (v4 / v5p / v7x) expose 2 TensorCores; v5e/v6e have 1."""
    try:
        kind = jax.devices()[0].device_kind.lower()
    except Exception:
        return 1
    return 2 if any(t in kind for t in ("v7", "v5p", "v4")) else 1


_NUM_TC = _num_tensorcores()


def _choose_tile_b(batch, num_cores):
    """Batch tile: >= num_cores grid steps (megacore), <= MAX_TILE_B rows."""
    target_steps = max(num_cores, pl.cdiv(batch, MAX_TILE_B))
    tile_b = _round_up(pl.cdiv(batch, target_steps), ROW)
    return max(ROW, min(tile_b, MAX_TILE_B))


def qnet_kernel(x_ref, w1_ref, b1_ref, w2_ref, b2_ref, o_ref):
    # Hidden layer: x @ w1 + b1, ReLU. MXU matmul; bias/ReLU ride VPU slots.
    h = jnp.dot(x_ref[...], w1_ref[...], preferred_element_type=jnp.float32)
    h = jnp.maximum(h + b1_ref[...], 0.0)           # b1 is (1, H_pad): broadcasts
    # Output layer: h @ w2 + b2 (lane-dense 128-wide store).
    y = jnp.dot(h, w2_ref[...], preferred_element_type=jnp.float32)
    o_ref[...] = y + b2_ref[...]


def prepare_params(w1, b1, w2, b2):
    """One-time zero-padding of params to lane-dense shapes (done at init).

    Weights are stored transposed vs PyTorch ([in, out]) so the kernel does
    plain row-major MXU matmuls. Padded columns/rows are zero, so results on
    the real slice are bit-identical.
    """
    d_in, hidden = w1.shape
    d_out = w2.shape[1]
    h_p = _round_up(hidden, LANE)
    d_out_p = _round_up(d_out, LANE)
    f32 = jnp.float32
    w1_p = jnp.pad(w1.astype(f32), ((0, 0), (0, h_p - hidden)))
    b1_p = jnp.pad(b1.astype(f32).reshape(1, hidden), ((0, 0), (0, h_p - hidden)))
    w2_p = jnp.pad(w2.astype(f32), ((0, h_p - hidden), (0, d_out_p - d_out)))
    b2_p = jnp.pad(b2.astype(f32).reshape(1, d_out), ((0, 0), (0, d_out_p - d_out)))
    return w1_p, b1_p, w2_p, b2_p, d_out


@functools.partial(jax.jit, static_argnames=("d_out", "tile_b"))
def _forward_impl(x, w1_p, b1_p, w2_p, b2_p, *, d_out, tile_b):
    x = x.astype(jnp.float32)               # no-op when already f32
    batch, d_in = x.shape
    d_out_p = w2_p.shape[1]
    b_p = _round_up(batch, tile_b)
    # Pad only the batch (sublane) axis, and only when needed. The feature
    # axis stays at the real D_in (block last dim == full array dim is legal).
    x_p = x if b_p == batch else jnp.pad(x, ((0, b_p - batch), (0, 0)))

    out_p = pl.pallas_call(
        qnet_kernel,
        out_shape=jax.ShapeDtypeStruct((b_p, d_out_p), jnp.float32),
        grid=(b_p // tile_b,),
        in_specs=[
            pl.BlockSpec((tile_b, d_in), lambda i: (i, 0)),   # x: tiled over B
            pl.BlockSpec(w1_p.shape, lambda i: (0, 0)),       # w1: VMEM-resident
            pl.BlockSpec(b1_p.shape, lambda i: (0, 0)),       # b1: VMEM-resident
            pl.BlockSpec(w2_p.shape, lambda i: (0, 0)),       # w2: VMEM-resident
            pl.BlockSpec(b2_p.shape, lambda i: (0, 0)),       # b2: VMEM-resident
        ],
        out_specs=pl.BlockSpec((tile_b, d_out_p), lambda i: (i, 0)),
        compiler_params=pltpu.CompilerParams(
            dimension_semantics=("parallel",)),
    )(x_p, w1_p, b1_p, w2_p, b2_p)

    # Only post-op: drop padded rows / lanes.
    return out_p[:batch, :d_out]


def linear_qnet_forward(x, params):
    """x: [B, D_in] f32; params: output of prepare_params()."""
    w1_p, b1_p, w2_p, b2_p, d_out = params
    tile_b = _choose_tile_b(x.shape[0], _NUM_TC)
    return _forward_impl(x, w1_p, b1_p, w2_p, b2_p, d_out=d_out, tile_b=tile_b)


def init_params(key, input_size, hidden_size, output_size):
    """Deterministic init mimicking nn.Linear default: U(-1/sqrt(fan_in), +)."""
    k1, k2, k3, k4 = jax.random.split(key, 4)
    bound1 = 1.0 / jnp.sqrt(jnp.float32(input_size))
    bound2 = 1.0 / jnp.sqrt(jnp.float32(hidden_size))
    # Stored already transposed relative to PyTorch ([in, out]).
    w1 = jax.random.uniform(k1, (input_size, hidden_size), jnp.float32,
                            -bound1, bound1)
    b1 = jax.random.uniform(k2, (hidden_size,), jnp.float32, -bound1, bound1)
    w2 = jax.random.uniform(k3, (hidden_size, output_size), jnp.float32,
                            -bound2, bound2)
    b2 = jax.random.uniform(k4, (output_size,), jnp.float32, -bound2, bound2)
    return w1, b1, w2, b2


def _reference(x, w1, b1, w2, b2):
    return jnp.maximum(x @ w1 + b1, 0.0) @ w2 + b2


if __name__ == "__main__":
    # Snake-style Q-net shapes: small features, replay-buffer-sized batch.
    input_size, hidden_size, output_size = 11, 64, 3

    key = jax.random.PRNGKey(0)
    kp, kx1, kx2, kx3 = jax.random.split(key, 4)
    w1, b1, w2, b2 = init_params(kp, input_size, hidden_size, output_size)
    params = prepare_params(w1, b1, w2, b2)   # padded once, reused every call

    # Replay-sized batch (multiple grid steps on megacore chips).
    x = jax.random.normal(kx1, (256, input_size), jnp.float32)
    out = jax.block_until_ready(linear_qnet_forward(x, params))
    ref = _reference(x, w1, b1, w2, b2)
    assert out.shape == (256, output_size)
    assert jnp.allclose(out, ref, atol=1e-5, rtol=1e-5)

    # Tiny batch (single 8-row tile, no lane padding on x).
    x_small = jax.random.normal(kx2, (8, input_size), jnp.float32)
    out_small = jax.block_until_ready(linear_qnet_forward(x_small, params))
    ref_small = _reference(x_small, w1, b1, w2, b2)
    assert out_small.shape == (8, output_size)
    assert jnp.allclose(out_small, ref_small, atol=1e-5, rtol=1e-5)

    # Non-tile-aligned batch (exercises the minimal row-only pad path).
    x_odd = jax.random.normal(kx3, (50, input_size), jnp.float32)
    out_odd = jax.block_until_ready(linear_qnet_forward(x_odd, params))
    ref_odd = _reference(x_odd, w1, b1, w2, b2)
    assert out_odd.shape == (50, output_size)
    assert jnp.allclose(out_odd, ref_odd, atol=1e-5, rtol=1e-5)

    # TODO(synk): Linear_QNet.save() (torch.save file I/O) has no Pallas
    # equivalent and is intentionally not implemented.
    print("KERNEL_OK")
</pallas_src>

<mosaic_0001>
module attributes {stable_mosaic.version = 11 : i64} {
  func.func @qnet_kernel(%arg0: i32, %arg1: memref<256x11xf32, #tpu.memory_space<vmem>>, %arg2: memref<11x128xf32, #tpu.memory_space<vmem>>, %arg3: memref<1x128xf32, #tpu.memory_space<vmem>>, %arg4: memref<128x128xf32, #tpu.memory_space<vmem>>, %arg5: memref<1x128xf32, #tpu.memory_space<vmem>>, %arg6: memref<256x128xf32, #tpu.memory_space<vmem>>) attributes {dimension_semantics = [#tpu.dimension_semantics<parallel>], iteration_bounds = array<i64: 1>, scalar_prefetch = 0 : i64, scratch_operands = 0 : i64, tpu.core_type = #tpu.core_type<tc>, window_params = [{transform_indices = @transform_0, window_bounds = array<i64: 256, 11>}, {pipeline_mode = #tpu.pipeline_mode<synchronous>, transform_indices = @transform_1, window_bounds = array<i64: 11, 128>}, {pipeline_mode = #tpu.pipeline_mode<synchronous>, transform_indices = @transform_2, window_bounds = array<i64: 1, 128>}, {pipeline_mode = #tpu.pipeline_mode<synchronous>, transform_indices = @transform_3, window_bounds = array<i64: 128, 128>}, {pipeline_mode = #tpu.pipeline_mode<synchronous>, transform_indices = @transform_4, window_bounds = array<i64: 1, 128>}, {transform_indices = @transform_5, window_bounds = array<i64: 256, 128>}]} {
    %c0 = arith.constant 0 : index
    %c0_0 = arith.constant 0 : index
    %0 = vector.load %arg1[%c0, %c0_0] : memref<256x11xf32, #tpu.memory_space<vmem>>, vector<256x11xf32>
    %c0_1 = arith.constant 0 : index
    %c0_2 = arith.constant 0 : index
    %1 = vector.load %arg2[%c0_1, %c0_2] : memref<11x128xf32, #tpu.memory_space<vmem>>, vector<11x128xf32>
    %cst = arith.constant dense<0.000000e+00> : vector<256x128xf32>
    %2 = tpu.matmul %0, %1, %cst {dimension_numbers = #tpu.dot_dimension_numbers<[1], [0], [0], [1], [0, 0, 1, 1], [], []>} : vector<256x11xf32>, vector<11x128xf32>, vector<256x128xf32> -> vector<256x128xf32>
    %c0_3 = arith.constant 0 : index
    %c0_4 = arith.constant 0 : index
    %3 = vector.load %arg3[%c0_3, %c0_4] : memref<1x128xf32, #tpu.memory_space<vmem>>, vector<1x128xf32>
    %4 = vector.broadcast %3 : vector<1x128xf32> to vector<256x128xf32>
    %5 = arith.addf %2, %4 : vector<256x128xf32>
    %cst_5 = arith.constant 0.000000e+00 : f32
    %6 = vector.broadcast %cst_5 : f32 to vector<256x128xf32>
    %7 = arith.maximumf %5, %6 : vector<256x128xf32>
    %c0_6 = arith.constant 0 : index
    %c0_7 = arith.constant 0 : index
    %8 = vector.load %arg4[%c0_6, %c0_7] : memref<128x128xf32, #tpu.memory_space<vmem>>, vector<128x128xf32>
    %cst_8 = arith.constant dense<0.000000e+00> : vector<256x128xf32>
    %9 = tpu.matmul %7, %8, %cst_8 {dimension_numbers = #tpu.dot_dimension_numbers<[1], [0], [0], [1], [0, 0, 1, 1], [], []>} : vector<256x128xf32>, vector<128x128xf32>, vector<256x128xf32> -> vector<256x128xf32>
    %c0_9 = arith.constant 0 : index
    %c0_10 = arith.constant 0 : index
    %10 = vector.load %arg5[%c0_9, %c0_10] : memref<1x128xf32, #tpu.memory_space<vmem>>, vector<1x128xf32>
    %11 = vector.broadcast %10 : vector<1x128xf32> to vector<256x128xf32>
    %12 = arith.addf %9, %11 : vector<256x128xf32>
    %c0_11 = arith.constant 0 : index
    %c0_12 = arith.constant 0 : index
    %13 = vector.load %arg6[%c0_11, %c0_12] : memref<256x128xf32, #tpu.memory_space<vmem>>, vector<256x128xf32>
    tpu.vector_store %arg6[%c0_11, %c0_12], %12 {strides = array<i32>} : memref<256x128xf32, #tpu.memory_space<vmem>>, vector<256x128xf32>,
    return
  }
  func.func @transform_0(%arg0: i32) -> (i32, i32) {
    %c0_i32 = arith.constant 0 : i32
    %c0_i32_0 = arith.constant 0 : i32
    return %arg0, %c0_i32 : i32, i32
  }
  func.func @transform_1(%arg0: i32) -> (i32, i32) {
    %c0_i32 = arith.constant 0 : i32
    %c0_i32_0 = arith.constant 0 : i32
    %c0_i32_1 = arith.constant 0 : i32
    return %c0_i32, %c0_i32_0 : i32, i32
  }
  func.func @transform_2(%arg0: i32) -> (i32, i32) {
    %c0_i32 = arith.constant 0 : i32
    %c0_i32_0 = arith.constant 0 : i32
    %c0_i32_1 = arith.constant 0 : i32
    return %c0_i32, %c0_i32_0 : i32, i32
  }
  func.func @transform_3(%arg0: i32) -> (i32, i32) {
    %c0_i32 = arith.constant 0 : i32
    %c0_i32_0 = arith.constant 0 : i32
    %c0_i32_1 = arith.constant 0 : i32
    return %c0_i32, %c0_i32_0 : i32, i32
  }
  func.func @transform_4(%arg0: i32) -> (i32, i32) {
    %c0_i32 = arith.constant 0 : i32
    %c0_i32_0 = arith.constant 0 : i32
    %c0_i32_1 = arith.constant 0 : i32
    return %c0_i32, %c0_i32_0 : i32, i32
  }
  func.func @transform_5(%arg0: i32) -> (i32, i32) {
    %c0_i32 = arith.constant 0 : i32
    %c0_i32_0 = arith.constant 0 : i32
    return %arg0, %c0_i32 : i32, i32
  }
}

</mosaic_0001>

<llo_original>
// kernel: _forward_impl.1
$region0: #{_forward_impl.1}
  #allocation0 [shape = 'u32[]', space=smem, size = 0x4, offset = 0x4, fixed_abs, tag = 'smem constant byte address 0x4 - core index']
  #allocation1 [shape = 'u32[144,128]{1,0:T(1,128)}', space=vmem, size = 0x12000, scoped, tag = 'internal scratch']
  %s0 = inlined_call_operand.vmem [shape: f32[256,11], index: 0, kind: input, shape index: {}]
  %s1 = inlined_call_operand.vmem [shape: f32[11,128], index: 1, kind: input, shape index: {}]
  %s2 = inlined_call_operand.vmem [shape: f32[1,128], index: 2, kind: input, shape index: {}]
  %s3 = inlined_call_operand.vmem [shape: f32[128,128], index: 3, kind: input, shape index: {}]
  %s4 = inlined_call_operand.vmem [shape: f32[1,128], index: 4, kind: input, shape index: {}]
  %s5 = inlined_call_operand.vmem [shape: f32[256,128], index: 5, kind: output, shape index: {}]
  %s6 = sld [smem:[#allocation0]]
  $region30: #{_forward_impl.1} parent=0
    _
  %s8 = ssub.s32 1, %s6
  %s9 = scalar_select 0, %s8, %s6
  // Predicated region
  $region2: #{_forward_impl.1} parent=0 // pred_check
    _
  $region3: #{_forward_impl.1} parent=0 // pred_check_branch
    %11 = sbr.rel (0) target = $region5
  $region4: #{_forward_impl.1} parent=0 // pred_region
    _
  $region5: #{_forward_impl.1} parent=0 // pred_fallthru
    _
  // Predicated region
  $region6: #{_forward_impl.1} parent=0 // pred_check
    _
  $region7: #{_forward_impl.1} parent=0 // pred_check_branch
    %13 = sbr.rel (0) target = $region9
  $region8: #{_forward_impl.1} parent=0 // pred_region
    _
  $region9: #{_forward_impl.1} parent=0 // pred_fallthru
    _
  // Predicated region
  $region10: #{_forward_impl.1} parent=0 // pred_check
    _
  $region11: #{_forward_impl.1} parent=0 // pred_check_branch
    %15 = sbr.rel (0) target = $region13
  $region12: #{_forward_impl.1} parent=0 // pred_region
    _
  $region13: #{_forward_impl.1} parent=0 // pred_fallthru
    _
  // Predicated region
  $region14: #{_forward_impl.1} parent=0 // pred_check
    _
  $region15: #{_forward_impl.1} parent=0 // pred_check_branch
    %17 = sbr.rel (0) target = $region17
  $region16: #{_forward_impl.1} parent=0 // pred_region
    _
  $region17: #{_forward_impl.1} parent=0 // pred_fallthru
    _
  // Predicated region
  $region18: #{_forward_impl.1} parent=0 // pred_check
    _
  $region19: #{_forward_impl.1} parent=0 // pred_check_branch
    %19 = sbr.rel (0) target = $region21
  $region20: #{_forward_impl.1} parent=0 // pred_region
    _
  $region21: #{_forward_impl.1} parent=0 // pred_fallthru
    _
  %v20 = vld [vmem:[%s0] sm:$0xff]
  %v21 = vld [vmem:[%s0 + $0x8] sm:$0xff]
  %v22 = vld [vmem:[%s0 + $0x10] sm:$0xff]
  %v23 = vld [vmem:[%s0 + $0x18] sm:$0xff]
  %v24 = vld [vmem:[%s0 + $0x20] sm:$0xff]
  %v25 = vld [vmem:[%s0 + $0x28] sm:$0xff]
  %v26 = vld [vmem:[%s0 + $0x30] sm:$0xff]
  %v27 = vld [vmem:[%s0 + $0x38] sm:$0xff]
  %v28 = vld [vmem:[%s0 + $0x40] sm:$0xff]
  %v29 = vld [vmem:[%s0 + $0x48] sm:$0xff]
  %v30 = vld [vmem:[%s0 + $0x50] sm:$0xff]
  %v31 = vld [vmem:[%s0 + $0x58] sm:$0xff]
  %v32 = vld [vmem:[%s0 + $0x60] sm:$0xff]
  %v33 = vld [vmem:[%s0 + $0x68] sm:$0xff]
  %v34 = vld [vmem:[%s0 + $0x70] sm:$0xff]
  %v35 = vld [vmem:[%s0 + $0x78] sm:$0xff]
  %v36 = vld [vmem:[%s0 + $0x80] sm:$0xff]
  %v37 = vld [vmem:[%s0 + $0x88] sm:$0xff]
  %v38 = vld [vmem:[%s0 + $0x90] sm:$0xff]
  %v39 = vld [vmem:[%s0 + $0x98] sm:$0xff]
  %v40 = vld [vmem:[%s0 + $0xa0] sm:$0xff]
  %v41 = vld [vmem:[%s0 + $0xa8] sm:$0xff]
  %v42 = vld [vmem:[%s0 + $0xb0] sm:$0xff]
  %v43 = vld [vmem:[%s0 + $0xb8] sm:$0xff]
  %v44 = vld [vmem:[%s0 + $0xc0] sm:$0xff]
  %v45 = vld [vmem:[%s0 + $0xc8] sm:$0xff]
  %v46 = vld [vmem:[%s0 + $0xd0] sm:$0xff]
  %v47 = vld [vmem:[%s0 + $0xd8] sm:$0xff]
  %v48 = vld [vmem:[%s0 + $0xe0] sm:$0xff]
  %v49 = vld [vmem:[%s0 + $0xe8] sm:$0xff]
  %v50 = vld [vmem:[%s0 + $0xf0] sm:$0xff]
  %v51 = vld [vmem:[%s0 + $0xf8] sm:$0xff]
  %v52 = vld [vmem:[%s1] sm:$0xff]
  %v53 = vld [vmem:[%s1 + $0x8] sm:$0x7]
  %v54 = vld [vmem:[%s2] sm:$0x1]
  %v56 = vlaneseq
  %v57 = vshrl.u32 %v56, 7
  %v58 = vsub.s32 0, %v57
  %v59 = vrot.slane %v54, %v58
  %vm61 = vcmask 89088
  %v63 = vsel %vm61, %v20, 0
  %v66 = vsel %vm61, %v21, 0
  %v69 = vsel %vm61, %v22, 0
  %v72 = vsel %vm61, %v23, 0
  %v75 = vsel %vm61, %v24, 0
  %v78 = vsel %vm61, %v25, 0
  %v81 = vsel %vm61, %v26, 0
  %v84 = vsel %vm61, %v27, 0
  %v87 = vsel %vm61, %v28, 0
  %v90 = vsel %vm61, %v29, 0
  %v93 = vsel %vm61, %v30, 0
  %v96 = vsel %vm61, %v31, 0
  %v99 = vsel %vm61, %v32, 0
  %v102 = vsel %vm61, %v33, 0
  %v105 = vsel %vm61, %v34, 0
  %v108 = vsel %vm61, %v35, 0
  %v111 = vsel %vm61, %v36, 0
  %v114 = vsel %vm61, %v37, 0
  %v117 = vsel %vm61, %v38, 0
  %v120 = vsel %vm61, %v39, 0
  %v123 = vsel %vm61, %v40, 0
  %v126 = vsel %vm61, %v41, 0
  %v129 = vsel %vm61, %v42, 0
  %v132 = vsel %vm61, %v43, 0
  %v135 = vsel %vm61, %v44, 0
  %v138 = vsel %vm61, %v45, 0
  %v141 = vsel %vm61, %v46, 0
  %v144 = vsel %vm61, %v47, 0
  %v147 = vsel %vm61, %v48, 0
  %v150 = vsel %vm61, %v49, 0
  %v153 = vsel %vm61, %v50, 0
  %v156 = vsel %vm61, %v51, 0
  %vm158 = vcmask 1042432
  %v160 = vsel %vm158, %v53, 0
  %162 = vmatprep.subr.mxu0 0.0
  %163 = vmatpush1.msra.mxu0 %v52
  %164 = vmatprep.subr.mxu0 0.0
  %165 = vmatpush1.msra.mxu0 %v160
  %166 = vmatprep.subr.mxu0 0.0
  %167 = vmatpush1.msra.mxu0 0.0
  %168 = vmatprep.subr.mxu0 0.0
  %169 = vmatpush1.msra.mxu0 0.0
  %170 = vmatprep.subr.mxu0 0.0
  %171 = vmatpush1.msra.mxu0 0.0
  %172 = vmatprep.subr.mxu0 0.0
  %173 = vmatpush1.msra.mxu0 0.0
  %174 = vmatprep.subr.mxu0 0.0
  %175 = vmatpush1.msra.mxu0 0.0
  %176 = vmatprep.subr.mxu0 0.0
  %177 = vmatpush1.msra.mxu0 0.0
  %178 = vmatprep.subr.mxu0 0.0
  %179 = vmatpush1.msra.mxu0 0.0
  %180 = vmatprep.subr.mxu0 0.0
  %181 = vmatpush1.msra.mxu0 0.0
  %182 = vmatprep.subr.mxu0 0.0
  %183 = vmatpush1.msra.mxu0 0.0
  %184 = vmatprep.subr.mxu0 0.0
  %185 = vmatpush1.msra.mxu0 0.0
  %186 = vmatprep.subr.mxu0 0.0
  %187 = vmatpush1.msra.mxu0 0.0
  %188 = vmatprep.subr.mxu0 0.0
  %189 = vmatpush1.msra.mxu0 0.0
  %190 = vmatprep.subr.mxu0 0.0
  %191 = vmatpush1.msra.mxu0 0.0
  %192 = vmatprep.subr.mxu0 0.0
  %193 = vmatpush1.msra.mxu0 0.0
  %194 = vmatprep.subr.mxu0 0.0
  %195 = vmatpush1.msra.mxu0 0.0
  %196 = vmatprep.subr.mxu0 0.0
  %197 = vmatpush1.msra.mxu0 0.0
  %198 = vmatprep.subr.mxu0 0.0
  %199 = vmatpush1.msra.mxu0 0.0
  %200 = vmatprep.subr.mxu0 0.0
  %201 = vmatpush1.msra.mxu0 0.0
  %202 = vmatprep.subr.mxu0 0.0
  %203 = vmatpush1.msra.mxu0 0.0
  %204 = vmatprep.subr.mxu0 0.0
  %205 = vmatpush1.msra.mxu0 0.0
  %206 = vmatprep.subr.mxu0 0.0
  %207 = vmatpush1.msra.mxu0 0.0
  %208 = vmatprep.subr.mxu0 0.0
  %209 = vmatpush1.msra.mxu0 0.0
  %210 = vmatprep.subr.mxu0 0.0
  %211 = vmatpush1.msra.mxu0 0.0
  %212 = vmatprep.subr.mxu0 0.0
  %213 = vmatpush1.msra.mxu0 0.0
  %214 = vmatprep.subr.mxu0 0.0
  %215 = vmatpush1.msra.mxu0 0.0
  %216 = vmatprep.subr.mxu0 0.0
  %217 = vmatpush1.msra.mxu0 0.0
  %218 = vmatprep.subr.mxu0 0.0
  %219 = vmatpush1.msra.mxu0 0.0
  %220 = vmatprep.subr.mxu0 0.0
  %221 = vmatpush1.msra.mxu0 0.0
  %222 = vmatprep.subr.mxu0 0.0
  %223 = vmatpush1.msra.mxu0 0.0
  %224 = vmatprep.subr.mxu0 0.0
  %225 = vmatpush1.msra.mxu0 0.0
  %226 = vmatprep.mubr.f32.mxu0 0.0
  %227 = vmatmul.mubr.f32.gmra.mrb[0].mxu0 %v63
  %v228 = vpop.f32.mrb[0].mxu0
  %v229 = vadd.f32 %v59, %v228
  %v230 = vpop.f32.mrb[0].mxu0
  %231 = vmatprep.mubr.f32.mxu0 0.0
  %232 = vmatmul.mubr.f32.gmra.mrb[0].mxu0 %v66
  %v233 = vpop.f32.mrb[0].mxu0
  %v234 = vadd.f32 %v59, %v233
  %v235 = vpop.f32.mrb[0].mxu0
  %236 = vmatprep.mubr.f32.mxu0 0.0
  %237 = vmatmul.mubr.f32.gmra.mrb[0].mxu0 %v69
  %v238 = vpop.f32.mrb[0].mxu0
  %v239 = vadd.f32 %v59, %v238
  %v240 = vpop.f32.mrb[0].mxu0
  %241 = vmatprep.mubr.f32.mxu0 0.0
  %242 = vmatmul.mubr.f32.gmra.mrb[0].mxu0 %v72
  %v243 = vpop.f32.mrb[0].mxu0
  %v244 = vadd.f32 %v59, %v243
  %v245 = vpop.f32.mrb[0].mxu0
  %246 = vmatprep.mubr.f32.mxu0 0.0
  %247 = vmatmul.mubr.f32.gmra.mrb[0].mxu0 %v75
  %v248 = vpop.f32.mrb[0].mxu0
  %v249 = vadd.f32 %v59, %v248
  %v250 = vpop.f32.mrb[0].mxu0
  %251 = vmatprep.mubr.f32.mxu0 0.0
  %252 = vmatmul.mubr.f32.gmra.mrb[0].mxu0 %v78
  %v253 = vpop.f32.mrb[0].mxu0
  %v254 = vadd.f32 %v59, %v253
  %v255 = vpop.f32.mrb[0].mxu0
  %256 = vmatprep.mubr.f32.mxu0 0.0
  %257 = vmatmul.mubr.f32.gmra.mrb[0].mxu0 %v81
  %v258 = vpop.f32.mrb[0].mxu0
  %v259 = vadd.f32 %v59, %v258
  %v260 = vpop.f32.mrb[0].mxu0
  %261 = vmatprep.mubr.f32.mxu0 0.0
  %262 = vmatmul.mubr.f32.gmra.mrb[0].mxu0 %v84
  %v263 = vpop.f32.mrb[0].mxu0
  %v264 = vadd.f32 %v59, %v263
  %v265 = vpop.f32.mrb[0].mxu0
  %266 = vmatprep.mubr.f32.mxu0 0.0
  %267 = vmatmul.mubr.f32.gmra.mrb[0].mxu0 %v87
  %v268 = vpop.f32.mrb[0].mxu0
  %v269 = vadd.f32 %v59, %v268
  %v270 = vpop.f32.mrb[0].mxu0
  %271 = vmatprep.mubr.f32.mxu0 0.0
  %272 = vmatmul.mubr.f32.gmra.mrb[0].mxu0 %v90
  %v273 = vpop.f32.mrb[0].mxu0
  %v274 = vadd.f32 %v59, %v273
  %v275 = vpop.f32.mrb[0].mxu0
  %276 = vmatprep.mubr.f32.mxu0 0.0
  %277 = vmatmul.mubr.f32.gmra.mrb[0].mxu0 %v93
  %v278 = vpop.f32.mrb[0].mxu0
  %v279 = vadd.f32 %v59, %v278
  %v280 = vpop.f32.mrb[0].mxu0
  %281 = vmatprep.mubr.f32.mxu0 0.0
  %282 = vmatmul.mubr.f32.gmra.mrb[0].mxu0 %v96
  %v283 = vpop.f32.mrb[0].mxu0
  %v284 = vadd.f32 %v59, %v283
  %v285 = vpop.f32.mrb[0].mxu0
  %286 = vmatprep.mubr.f32.mxu0 0.0
  %287 = vmatmul.mubr.f32.gmra.mrb[0].mxu0 %v99
  %v288 = vpop.f32.mrb[0].mxu0
  %v289 = vadd.f32 %v59, %v288
  %v290 = vpop.f32.mrb[0].mxu0
  %291 = vmatprep.mubr.f32.mxu0 0.0
  %292 = vmatmul.mubr.f32.gmra.mrb[0].mxu0 %v102
  %v293 = vpop.f32.mrb[0].mxu0
  %v294 = vadd.f32 %v59, %v293
  %v295 = vpop.f32.mrb[0].mxu0
  %296 = vmatprep.mubr.f32.mxu0 0.0
  %297 = vmatmul.mubr.f32.gmra.mrb[0].mxu0 %v105
  %v298 = vpop.f32.mrb[0].mxu0
  %v299 = vadd.f32 %v59, %v298
  %v300 = vpop.f32.mrb[0].mxu0
  %301 = vmatprep.mubr.f32.mxu0 0.0
  %302 = vmatmul.mubr.f32.gmra.mrb[0].mxu0 %v108
  %v303 = vpop.f32.mrb[0].mxu0
  %v304 = vadd.f32 %v59, %v303
  %v305 = vpop.f32.mrb[0].mxu0
  %306 = vmatprep.mubr.f32.mxu0 0.0
  %307 = vmatmul.mubr.f32.gmra.mrb[0].mxu0 %v111
  %v308 = vpop.f32.mrb[0].mxu0
  %v309 = vadd.f32 %v59, %v308
  %v310 = vpop.f32.mrb[0].mxu0
  %311 = vmatprep.mubr.f32.mxu0 0.0
  %312 = vmatmul.mubr.f32.gmra.mrb[0].mxu0 %v114
  %v313 = vpop.f32.mrb[0].mxu0
  %v314 = vadd.f32 %v59, %v313
  %v315 = vpop.f32.mrb[0].mxu0
  %316 = vmatprep.mubr.f32.mxu0 0.0
  %317 = vmatmul.mubr.f32.gmra.mrb[0].mxu0 %v117
  %v318 = vpop.f32.mrb[0].mxu0
  %v319 = vadd.f32 %v59, %v318
  %v320 = vpop.f32.mrb[0].mxu0
  %321 = vmatprep.mubr.f32.mxu0 0.0
  %322 = vmatmul.mubr.f32.gmra.mrb[0].mxu0 %v120
  %v323 = vpop.f32.mrb[0].mxu0
  %v324 = vadd.f32 %v59, %v323
  %v325 = vpop.f32.mrb[0].mxu0
  %326 = vmatprep.mubr.f32.mxu0 0.0
  %327 = vmatmul.mubr.f32.gmra.mrb[0].mxu0 %v123
  %v328 = vpop.f32.mrb[0].mxu0
  %v329 = vadd.f32 %v59, %v328
  %v330 = vpop.f32.mrb[0].mxu0
  %331 = vmatprep.mubr.f32.mxu0 0.0
  %332 = vmatmul.mubr.f32.gmra.mrb[0].mxu0 %v126
  %v333 = vpop.f32.mrb[0].mxu0
  %v334 = vadd.f32 %v59, %v333
  %v335 = vpop.f32.mrb[0].mxu0
  %336 = vmatprep.mubr.f32.mxu0 0.0
  %337 = vmatmul.mubr.f32.gmra.mrb[0].mxu0 %v129
  %v338 = vpop.f32.mrb[0].mxu0
  %v339 = vadd.f32 %v59, %v338
  %v340 = vpop.f32.mrb[0].mxu0
  %341 = vmatprep.mubr.f32.mxu0 0.0
  %342 = vmatmul.mubr.f32.gmra.mrb[0].mxu0 %v132
  %v343 = vpop.f32.mrb[0].mxu0
  %v344 = vadd.f32 %v59, %v343
  %v345 = vpop.f32.mrb[0].mxu0
  %346 = vmatprep.mubr.f32.mxu0 0.0
  %347 = vmatmul.mubr.f32.gmra.mrb[0].mxu0 %v135
  %v348 = vpop.f32.mrb[0].mxu0
  %v349 = vadd.f32 %v59, %v348
  %v350 = vpop.f32.mrb[0].mxu0
  %351 = vmatprep.mubr.f32.mxu0 0.0
  %352 = vmatmul.mubr.f32.gmra.mrb[0].mxu0 %v138
  %v353 = vpop.f32.mrb[0].mxu0
  %v354 = vadd.f32 %v59, %v353
  %v355 = vpop.f32.mrb[0].mxu0
  %356 = vmatprep.mubr.f32.mxu0 0.0
  %357 = vmatmul.mubr.f32.gmra.mrb[0].mxu0 %v141
  %v358 = vpop.f32.mrb[0].mxu0
  %v359 = vadd.f32 %v59, %v358
  %v360 = vpop.f32.mrb[0].mxu0
  %361 = vmatprep.mubr.f32.mxu0 0.0
  %362 = vmatmul.mubr.f32.gmra.mrb[0].mxu0 %v144
  %v363 = vpop.f32.mrb[0].mxu0
  %v364 = vadd.f32 %v59, %v363
  %v365 = vpop.f32.mrb[0].mxu0
  %366 = vmatprep.mubr.f32.mxu0 0.0
  %367 = vmatmul.mubr.f32.gmra.mrb[0].mxu0 %v147
  %v368 = vpop.f32.mrb[0].mxu0
  %v369 = vadd.f32 %v59, %v368
  %v370 = vpop.f32.mrb[0].mxu0
  %371 = vmatprep.mubr.f32.mxu0 0.0
  %372 = vmatmul.mubr.f32.gmra.mrb[0].mxu0 %v150
  %v373 = vpop.f32.mrb[0].mxu0
  %v374 = vadd.f32 %v59, %v373
  %v375 = vpop.f32.mrb[0].mxu0
  %376 = vmatprep.mubr.f32.mxu0 0.0
  %377 = vmatmul.mubr.f32.gmra.mrb[0].mxu0 %v153
  %v378 = vpop.f32.mrb[0].mxu0
  %v379 = vadd.f32 %v59, %v378
  %v380 = vpop.f32.mrb[0].mxu0
  %381 = vmatprep.mubr.f32.mxu0 0.0
  %382 = vmatmul.mubr.f32.gmra.mrb[0].mxu0 %v156
  %v383 = vpop.f32.mrb[0].mxu0
  %v384 = vadd.f32 %v59, %v383
  %v385 = vpop.f32.mrb[0].mxu0
  %386 = vdwg.mxu0
  %v387 = vmax.f32 %v229, 0.0
  %v388 = vmax.f32 %v234, 0.0
  %v389 = vmax.f32 %v239, 0.0
  %v390 = vmax.f32 %v244, 0.0
  %v391 = vmax.f32 %v249, 0.0
  %v392 = vmax.f32 %v254, 0.0
  %v393 = vmax.f32 %v259, 0.0
  %v394 = vmax.f32 %v264, 0.0
  %v395 = vmax.f32 %v269, 0.0
  %v396 = vmax.f32 %v274, 0.0
  %v397 = vmax.f32 %v279, 0.0
  %v398 = vmax.f32 %v284, 0.0
  %v399 = vmax.f32 %v289, 0.0
  %v400 = vmax.f32 %v294, 0.0
  %v401 = vmax.f32 %v299, 0.0
  %v402 = vmax.f32 %v304, 0.0
  %v403 = vmax.f32 %v309, 0.0
  %v404 = vmax.f32 %v314, 0.0
  %v405 = vmax.f32 %v319, 0.0
  %v406 = vmax.f32 %v324, 0.0
  %v407 = vmax.f32 %v329, 0.0
  %v408 = vmax.f32 %v334, 0.0
  %v409 = vmax.f32 %v339, 0.0
  %v410 = vmax.f32 %v344, 0.0
  %v411 = vmax.f32 %v349, 0.0
  %v412 = vmax.f32 %v354, 0.0
  %v413 = vmax.f32 %v359, 0.0
  %v414 = vmax.f32 %v364, 0.0
  %v415 = vmax.f32 %v369, 0.0
  %v416 = vmax.f32 %v374, 0.0
  %v417 = vmax.f32 %v379, 0.0
  %v418 = vmax.f32 %v384, 0.0
  %v419 = vld [vmem:[%s3] sm:$0xff]
  %v420 = vld [vmem:[%s3 + $0x8] sm:$0xff]
  %v421 = vld [vmem:[%s3 + $0x10] sm:$0xff]
  %v422 = vld [vmem:[%s3 + $0x18] sm:$0xff]
  %v423 = vld [vmem:[%s3 + $0x20] sm:$0xff]
  %v424 = vld [vmem:[%s3 + $0x28] sm:$0xff]
  %v425 = vld [vmem:[%s3 + $0x30] sm:$0xff]
  %v426 = vld [vmem:[%s3 + $0x38] sm:$0xff]
  %v427 = vld [vmem:[%s3 + $0x40] sm:$0xff]
  %v428 = vld [vmem:[%s3 + $0x48] sm:$0xff]
  %v429 = vld [vmem:[%s3 + $0x50] sm:$0xff]
  %v430 = vld [vmem:[%s3 + $0x58] sm:$0xff]
  %v431 = vld [vmem:[%s3 + $0x60] sm:$0xff]
  %v432 = vld [vmem:[%s3 + $0x68] sm:$0xff]
  %v433 = vld [vmem:[%s3 + $0x70] sm:$0xff]
  %v434 = vld [vmem:[%s3 + $0x78] sm:$0xff]
  %v435 = vld [vmem:[%s4] sm:$0x1]
  %v437 = vlaneseq
  %v438 = vshrl.u32 %v437, 7
  %v439 = vsub.s32 0, %v438
  %v440 = vrot.slane %v435, %v439
  %442 = vmatprep.subr.mxu0 0.0
  %443 = vmatpush1.msra.mxu0 %v419
  %444 = vmatprep.subr.mxu0 0.0
  %445 = vmatpush1.msra.mxu0 %v420
  %446 = vmatprep.subr.mxu0 0.0
  %447 = vmatpush1.msra.mxu0 %v421
  %448 = vmatprep.subr.mxu0 0.0
  %449 = vmatpush1.msra.mxu0 %v422
  %450 = vmatprep.subr.mxu0 0.0
  %451 = vmatpush1.msra.mxu0 %v423
  %452 = vmatprep.subr.mxu0 0.0
  %453 = vmatpush1.msra.mxu0 %v424
  %454 = vmatprep.subr.mxu0 0.0
  %455 = vmatpush1.msra.mxu0 %v425
  %456 = vmatprep.subr.mxu0 0.0
  %457 = vmatpush1.msra.mxu0 %v426
  %458 = vmatprep.subr.mxu0 0.0
  %459 = vmatpush1.msra.mxu0 %v427
  %460 = vmatprep.subr.mxu0 0.0
  %461 = vmatpush1.msra.mxu0 %v428
  %462 = vmatprep.subr.mxu0 0.0
  %463 = vmatpush1.msra.mxu0 %v429
  %464 = vmatprep.subr.mxu0 0.0
  %465 = vmatpush1.msra.mxu0 %v430
  %466 = vmatprep.subr.mxu0 0.0
  %467 = vmatpush1.msra.mxu0 %v431
  %468 = vmatprep.subr.mxu0 0.0
  %469 = vmatpush1.msra.mxu0 %v432
  %470 = vmatprep.subr.mxu0 0.0
  %471 = vmatpush1.msra.mxu0 %v433
  %472 = vmatprep.subr.mxu0 0.0
  %473 = vmatpush1.msra.mxu0 %v434
  %474 = vmatprep.subr.mxu0 0.0
  %475 = vmatpush1.msra.mxu0 0.0
  %476 = vmatprep.subr.mxu0 0.0
  %477 = vmatpush1.msra.mxu0 0.0
  %478 = vmatprep.subr.mxu0 0.0
  %479 = vmatpush1.msra.mxu0 0.0
  %480 = vmatprep.subr.mxu0 0.0
  %481 = vmatpush1.msra.mxu0 0.0
  %482 = vmatprep.subr.mxu0 0.0
  %483 = vmatpush1.msra.mxu0 0.0
  %484 = vmatprep.subr.mxu0 0.0
  %485 = vmatpush1.msra.mxu0 0.0
  %486 = vmatprep.subr.mxu0 0.0
  %487 = vmatpush1.msra.mxu0 0.0
  %488 = vmatprep.subr.mxu0 0.0
  %489 = vmatpush1.msra.mxu0 0.0
  %490 = vmatprep.subr.mxu0 0.0
  %491 = vmatpush1.msra.mxu0 0.0
  %492 = vmatprep.subr.mxu0 0.0
  %493 = vmatpush1.msra.mxu0 0.0
  %494 = vmatprep.subr.mxu0 0.0
  %495 = vmatpush1.msra.mxu0 0.0
  %496 = vmatprep.subr.mxu0 0.0
  %497 = vmatpush1.msra.mxu0 0.0
  %498 = vmatprep.subr.mxu0 0.0
  %499 = vmatpush1.msra.mxu0 0.0
  %500 = vmatprep.subr.mxu0 0.0
  %501 = vmatpush1.msra.mxu0 0.0
  %502 = vmatprep.subr.mxu0 0.0
  %503 = vmatpush1.msra.mxu0 0.0
  %504 = vmatprep.subr.mxu0 0.0
  %505 = vmatpush1.msra.mxu0 0.0
  %506 = vmatprep.mubr.f32.mxu0 0.0
  %507 = vmatmul.mubr.f32.gmra.mrb[0].mxu0 %v387
  %v508 = vpop.f32.mrb[0].mxu0
  %v509 = vadd.f32 %v440, %v508
  %v510 = vpop.f32.mrb[0].mxu0
  %511 = vmatprep.mubr.f32.mxu0 0.0
  %512 = vmatmul.mubr.f32.gmra.mrb[0].mxu0 %v388
  %v513 = vpop.f32.mrb[0].mxu0
  %v514 = vadd.f32 %v440, %v513
  %v515 = vpop.f32.mrb[0].mxu0
  %516 = vmatprep.mubr.f32.mxu0 0.0
  %517 = vmatmul.mubr.f32.gmra.mrb[0].mxu0 %v389
  %v518 = vpop.f32.mrb[0].mxu0
  %v519 = vadd.f32 %v440, %v518
  %v520 = vpop.f32.mrb[0].mxu0
  %521 = vmatprep.mubr.f32.mxu0 0.0
  %522 = vmatmul.mubr.f32.gmra.mrb[0].mxu0 %v390
  %v523 = vpop.f32.mrb[0].mxu0
  %v524 = vadd.f32 %v440, %v523
  %v525 = vpop.f32.mrb[0].mxu0
  %526 = vmatprep.mubr.f32.mxu0 0.0
  %527 = vmatmul.mubr.f32.gmra.mrb[0].mxu0 %v391
  %v528 = vpop.f32.mrb[0].mxu0
  %v529 = vadd.f32 %v440, %v528
  %v530 = vpop.f32.mrb[0].mxu0
  %531 = vmatprep.mubr.f32.mxu0 0.0
  %532 = vmatmul.mubr.f32.gmra.mrb[0].mxu0 %v392
  %v533 = vpop.f32.mrb[0].mxu0
  %v534 = vadd.f32 %v440, %v533
  %v535 = vpop.f32.mrb[0].mxu0
  %536 = vmatprep.mubr.f32.mxu0 0.0
  %537 = vmatmul.mubr.f32.gmra.mrb[0].mxu0 %v393
  %v538 = vpop.f32.mrb[0].mxu0
  %v539 = vadd.f32 %v440, %v538
  %v540 = vpop.f32.mrb[0].mxu0
  %541 = vmatprep.mubr.f32.mxu0 0.0
  %542 = vmatmul.mubr.f32.gmra.mrb[0].mxu0 %v394
  %v543 = vpop.f32.mrb[0].mxu0
  %v544 = vadd.f32 %v440, %v543
  %v545 = vpop.f32.mrb[0].mxu0
  %546 = vmatprep.mubr.f32.mxu0 0.0
  %547 = vmatmul.mubr.f32.gmra.mrb[0].mxu0 %v395
  %v548 = vpop.f32.mrb[0].mxu0
  %v549 = vadd.f32 %v440, %v548
  %v550 = vpop.f32.mrb[0].mxu0
  %551 = vmatprep.mubr.f32.mxu0 0.0
  %552 = vmatmul.mubr.f32.gmra.mrb[0].mxu0 %v396
  %v553 = vpop.f32.mrb[0].mxu0
  %v554 = vadd.f32 %v440, %v553
  %v555 = vpop.f32.mrb[0].mxu0
  %556 = vmatprep.mubr.f32.mxu0 0.0
  %557 = vmatmul.mubr.f32.gmra.mrb[0].mxu0 %v397
  %v558 = vpop.f32.mrb[0].mxu0
  %v559 = vadd.f32 %v440, %v558
  %v560 = vpop.f32.mrb[0].mxu0
  %561 = vmatprep.mubr.f32.mxu0 0.0
  %562 = vmatmul.mubr.f32.gmra.mrb[0].mxu0 %v398
  %v563 = vpop.f32.mrb[0].mxu0
  %v564 = vadd.f32 %v440, %v563
  %v565 = vpop.f32.mrb[0].mxu0
  %566 = vmatprep.mubr.f32.mxu0 0.0
  %567 = vmatmul.mubr.f32.gmra.mrb[0].mxu0 %v399
  %v568 = vpop.f32.mrb[0].mxu0
  %v569 = vadd.f32 %v440, %v568
  %v570 = vpop.f32.mrb[0].mxu0
  %571 = vmatprep.mubr.f32.mxu0 0.0
  %572 = vmatmul.mubr.f32.gmra.mrb[0].mxu0 %v400
  %v573 = vpop.f32.mrb[0].mxu0
  %v574 = vadd.f32 %v440, %v573
  %v575 = vpop.f32.mrb[0].mxu0
  %576 = vmatprep.mubr.f32.mxu0 0.0
  %577 = vmatmul.mubr.f32.gmra.mrb[0].mxu0 %v401
  %v578 = vpop.f32.mrb[0].mxu0
  %v579 = vadd.f32 %v440, %v578
  %v580 = vpop.f32.mrb[0].mxu0
  %581 = vmatprep.mubr.f32.mxu0 0.0
  %582 = vmatmul.mubr.f32.gmra.mrb[0].mxu0 %v402
  %v583 = vpop.f32.mrb[0].mxu0
  %v584 = vadd.f32 %v440, %v583
  %v585 = vpop.f32.mrb[0].mxu0
  %586 = vmatprep.mubr.f32.mxu0 0.0
  %587 = vmatmul.mubr.f32.gmra.mrb[0].mxu0 %v403
  %v588 = vpop.f32.mrb[0].mxu0
  %v589 = vadd.f32 %v440, %v588
  %v590 = vpop.f32.mrb[0].mxu0
  %591 = vmatprep.mubr.f32.mxu0 0.0
  %592 = vmatmul.mubr.f32.gmra.mrb[0].mxu0 %v404
  %v593 = vpop.f32.mrb[0].mxu0
  %v594 = vadd.f32 %v440, %v593
  %v595 = vpop.f32.mrb[0].mxu0
  %596 = vmatprep.mubr.f32.mxu0 0.0
  %597 = vmatmul.mubr.f32.gmra.mrb[0].mxu0 %v405
  %v598 = vpop.f32.mrb[0].mxu0
  %v599 = vadd.f32 %v440, %v598
  %v600 = vpop.f32.mrb[0].mxu0
  %601 = vmatprep.mubr.f32.mxu0 0.0
  %602 = vmatmul.mubr.f32.gmra.mrb[0].mxu0 %v406
  %v603 = vpop.f32.mrb[0].mxu0
  %v604 = vadd.f32 %v440, %v603
  %v605 = vpop.f32.mrb[0].mxu0
  %606 = vmatprep.mubr.f32.mxu0 0.0
  %607 = vmatmul.mubr.f32.gmra.mrb[0].mxu0 %v407
  %v608 = vpop.f32.mrb[0].mxu0
  %v609 = vadd.f32 %v440, %v608
  %v610 = vpop.f32.mrb[0].mxu0
  %611 = vmatprep.mubr.f32.mxu0 0.0
  %612 = vmatmul.mubr.f32.gmra.mrb[0].mxu0 %v408
  %v613 = vpop.f32.mrb[0].mxu0
  %v614 = vadd.f32 %v440, %v613
  %v615 = vpop.f32.mrb[0].mxu0
  %616 = vmatprep.mubr.f32.mxu0 0.0
  %617 = vmatmul.mubr.f32.gmra.mrb[0].mxu0 %v409
  %v618 = vpop.f32.mrb[0].mxu0
  %v619 = vadd.f32 %v440, %v618
  %v620 = vpop.f32.mrb[0].mxu0
  %621 = vmatprep.mubr.f32.mxu0 0.0
  %622 = vmatmul.mubr.f32.gmra.mrb[0].mxu0 %v410
  %v623 = vpop.f32.mrb[0].mxu0
  %v624 = vadd.f32 %v440, %v623
  %v625 = vpop.f32.mrb[0].mxu0
  %626 = vmatprep.mubr.f32.mxu0 0.0
  %627 = vmatmul.mubr.f32.gmra.mrb[0].mxu0 %v411
  %v628 = vpop.f32.mrb[0].mxu0
  %v629 = vadd.f32 %v440, %v628
  %v630 = vpop.f32.mrb[0].mxu0
  %631 = vmatprep.mubr.f32.mxu0 0.0
  %632 = vmatmul.mubr.f32.gmra.mrb[0].mxu0 %v412
  %v633 = vpop.f32.mrb[0].mxu0
  %v634 = vadd.f32 %v440, %v633
  %v635 = vpop.f32.mrb[0].mxu0
  %636 = vmatprep.mubr.f32.mxu0 0.0
  %637 = vmatmul.mubr.f32.gmra.mrb[0].mxu0 %v413
  %v638 = vpop.f32.mrb[0].mxu0
  %v639 = vadd.f32 %v440, %v638
  %v640 = vpop.f32.mrb[0].mxu0
  %641 = vmatprep.mubr.f32.mxu0 0.0
  %642 = vmatmul.mubr.f32.gmra.mrb[0].mxu0 %v414
  %v643 = vpop.f32.mrb[0].mxu0
  %v644 = vadd.f32 %v440, %v643
  %v645 = vpop.f32.mrb[0].mxu0
  %646 = vmatprep.mubr.f32.mxu0 0.0
  %647 = vmatmul.mubr.f32.gmra.mrb[0].mxu0 %v415
  %v648 = vpop.f32.mrb[0].mxu0
  %v649 = vadd.f32 %v440, %v648
  %v650 = vpop.f32.mrb[0].mxu0
  %651 = vmatprep.mubr.f32.mxu0 0.0
  %652 = vmatmul.mubr.f32.gmra.mrb[0].mxu0 %v416
  %v653 = vpop.f32.mrb[0].mxu0
  %v654 = vadd.f32 %v440, %v653
  %v655 = vpop.f32.mrb[0].mxu0
  %656 = vmatprep.mubr.f32.mxu0 0.0
  %657 = vmatmul.mubr.f32.gmra.mrb[0].mxu0 %v417
  %v658 = vpop.f32.mrb[0].mxu0
  %v659 = vadd.f32 %v440, %v658
  %v660 = vpop.f32.mrb[0].mxu0
  %661 = vmatprep.mubr.f32.mxu0 0.0
  %662 = vmatmul.mubr.f32.gmra.mrb[0].mxu0 %v418
  %v663 = vpop.f32.mrb[0].mxu0
  %v664 = vadd.f32 %v440, %v663
  %v665 = vpop.f32.mrb[0].mxu0
  %666 = vdwg.mxu0
  %667 = vst [vmem:[%s5] sm:$0xff] %v509
  %668 = vst [vmem:[%s5 + $0x8] sm:$0xff] %v514
  %669 = vst [vmem:[%s5 + $0x10] sm:$0xff] %v519
  %670 = vst [vmem:[%s5 + $0x18] sm:$0xff] %v524
  %671 = vst [vmem:[%s5 + $0x20] sm:$0xff] %v529
  %672 = vst [vmem:[%s5 + $0x28] sm:$0xff] %v534
  %673 = vst [vmem:[%s5 + $0x30] sm:$0xff] %v539
  %674 = vst [vmem:[%s5 + $0x38] sm:$0xff] %v544
  %675 = vst [vmem:[%s5 + $0x40] sm:$0xff] %v549
  %676 = vst [vmem:[%s5 + $0x48] sm:$0xff] %v554
  %677 = vst [vmem:[%s5 + $0x50] sm:$0xff] %v559
  %678 = vst [vmem:[%s5 + $0x58] sm:$0xff] %v564
  %679 = vst [vmem:[%s5 + $0x60] sm:$0xff] %v569
  %680 = vst [vmem:[%s5 + $0x68] sm:$0xff] %v574
  %681 = vst [vmem:[%s5 + $0x70] sm:$0xff] %v579
  %682 = vst [vmem:[%s5 + $0x78] sm:$0xff] %v584
  %683 = vst [vmem:[%s5 + $0x80] sm:$0xff] %v589
  %684 = vst [vmem:[%s5 + $0x88] sm:$0xff] %v594
  %685 = vst [vmem:[%s5 + $0x90] sm:$0xff] %v599
  %686 = vst [vmem:[%s5 + $0x98] sm:$0xff] %v604
  %687 = vst [vmem:[%s5 + $0xa0] sm:$0xff] %v609
  %688 = vst [vmem:[%s5 + $0xa8] sm:$0xff] %v614
  %689 = vst [vmem:[%s5 + $0xb0] sm:$0xff] %v619
  %690 = vst [vmem:[%s5 + $0xb8] sm:$0xff] %v624
  %691 = vst [vmem:[%s5 + $0xc0] sm:$0xff] %v629
  %692 = vst [vmem:[%s5 + $0xc8] sm:$0xff] %v634
  %693 = vst [vmem:[%s5 + $0xd0] sm:$0xff] %v639
  %694 = vst [vmem:[%s5 + $0xd8] sm:$0xff] %v644
  %695 = vst [vmem:[%s5 + $0xe0] sm:$0xff] %v649
  %696 = vst [vmem:[%s5 + $0xe8] sm:$0xff] %v654
  %697 = vst [vmem:[%s5 + $0xf0] sm:$0xff] %v659
  %698 = vst [vmem:[%s5 + $0xf8] sm:$0xff] %v664
  // Predicated region
  $region22: #{_forward_impl.1} parent=0 // pred_check
    _
  $region23: #{_forward_impl.1} parent=0 // pred_check_branch
    %700 = sbr.rel (0) target = $region25
  $region24: #{_forward_impl.1} parent=0 // pred_region
    _
  $region25: #{_forward_impl.1} parent=0 // pred_fallthru
    _
  // Predicated region
  $region26: #{_forward_impl.1} parent=0 // pred_check
    _
  $region27: #{_forward_impl.1} parent=0 // pred_check_branch
    %702 = sbr.rel (0) target = $region29
  $region28: #{_forward_impl.1} parent=0 // pred_region
    _
  $region29: #{_forward_impl.1} parent=0 // pred_fallthru
    _

</llo_original>
